<compile_context>
chip_gen: v5e
topology: v5e:2x2
jax: 0.10.0
libtpu: 0.0.40
codegen_flags: <defaults>
</compile_context>

<pallas_src>
import math
import functools

import jax
import jax.numpy as jnp
from jax.experimental import pallas as pl
from jax.experimental.pallas import tpu as pltpu


def _pick_tile(s: int, target: int) -> int:
    """Largest tile <= target that evenly divides s, preferring multiples of
    128 (MXU-friendly), then multiples of 8, falling back to the full dim."""
    if s <= target:
        return s
    for step in (128, 8):
        t = (target // step) * step
        while t >= step:
            if s % t == 0:
                return t
            t -= step
    return s


def _vmem_limit_bytes():
    """Generation-aware VMEM limit: physical capacity minus ~16 MiB headroom
    (so v7x's 64 MiB is not fully claimed, while v5e/v6e can use >64 MiB).
    Returns None (compiler default) if the TPU cannot be queried."""
    try:
        cap = int(pltpu.get_tpu_info().vmem_capacity_bytes)
        return max(cap - 16 * 1024 * 1024, 32 * 1024 * 1024)
    except Exception:
        return None


def _compiler_params(dimension_semantics, vmem_limit):
    kwargs = dict(dimension_semantics=dimension_semantics)
    if vmem_limit is not None:
        kwargs["vmem_limit_bytes"] = vmem_limit
    return pltpu.CompilerParams(**kwargs)


# ----------------------------- kernel 1: fused QKV projection ------------------------

def _qkv_proj_kernel(x_ref, w_ref, b_ref, q_ref, k_ref, v_ref, *, dh: int):
    x = x_ref[0]            # (ts, D)
    w = w_ref[0]            # (D, 3*dh), pre-transposed; Q cols pre-scaled by 1/sqrt(dh)
    y = jnp.dot(x, w, preferred_element_type=jnp.float32) + b_ref[0]   # (ts, 3*dh)
    q_ref[0, 0] = y[:, :dh].astype(q_ref.dtype)
    k_ref[0, 0] = y[:, dh:2 * dh].astype(k_ref.dtype)
    v_ref[0, 0] = y[:, 2 * dh:].astype(v_ref.dtype)


# ----------------------------- kernel 2: flash attention -----------------------------

def _flash_attn_kernel(q_ref, k_ref, v_ref, o_ref, m_ref, l_ref, acc_ref,
                       *, causal_mask: bool, tq: int, tk: int):
    # Program ids hoisted to kernel top level (NOT inside pl.when branches).
    qi = pl.program_id(2)
    ki = pl.program_id(3)
    nk = pl.num_programs(3)

    @pl.when(ki == 0)
    def _init():
        m_ref[...] = jnp.full(m_ref.shape, -jnp.inf, jnp.float32)
        l_ref[...] = jnp.zeros(l_ref.shape, jnp.float32)
        acc_ref[...] = jnp.zeros(acc_ref.shape, jnp.float32)

    def _body(masked: bool):
        q = q_ref[0, 0]          # (tq, dh), already scaled by 1/sqrt(dh)
        k = k_ref[0, 0]          # (tk, dh)
        # q @ k^T via dot_general contracting the last dims (no resident .T).
        s = jax.lax.dot_general(q, k, (((1,), (1,)), ((), ())),
                                preferred_element_type=jnp.float32)   # (tq, tk)
        if masked:
            row = qi * tq + jax.lax.broadcasted_iota(jnp.int32, (tq, tk), 0)
            col = ki * tk + jax.lax.broadcasted_iota(jnp.int32, (tq, tk), 1)
            s = jnp.where(col > row, -jnp.inf, s)

        m_prev = m_ref[...]                                  # (tq, 1)
        m_new = jnp.maximum(m_prev, jnp.max(s, axis=-1, keepdims=True))
        alpha = jnp.exp(m_prev - m_new)
        p = jnp.exp(s - m_new)                               # (tq, tk) f32
        l_ref[...] = alpha * l_ref[...] + jnp.sum(p, axis=-1, keepdims=True)
        acc_ref[...] = alpha * acc_ref[...] + jnp.dot(
            p.astype(v_ref.dtype), v_ref[0, 0], preferred_element_type=jnp.float32)
        m_ref[...] = m_new

    if causal_mask:
        # Tile classification (all static arithmetic on hoisted program ids):
        #   needed    : tile is not entirely above the diagonal (else skip)
        #   straddles : tile crosses the diagonal (else no mask needed)
        needed = ki * tk <= qi * tq + (tq - 1)
        straddles = ki * tk + (tk - 1) > qi * tq
        pl.when(jnp.logical_and(needed, straddles))(lambda: _body(True))
        pl.when(jnp.logical_and(needed, jnp.logical_not(straddles)))(lambda: _body(False))
    else:
        _body(False)

    @pl.when(ki == nk - 1)
    def _finalize():
        # One (tq,1) reciprocal then a broadcast multiply.  Plain divide keeps
        # this portable (pl.reciprocal(approx=True) is a TPU-only EUP fast path).
        inv_l = 1.0 / l_ref[...]
        o_ref[0, 0] = (acc_ref[...] * inv_l).astype(o_ref.dtype)


# ----------------------------- kernel 3: out-proj with fused head merge --------------

def _out_proj_kernel(a_ref, w_ref, b_ref, o_ref, acc_ref):
    h = pl.program_id(2)
    nh = pl.num_programs(2)

    @pl.when(h == 0)
    def _init():
        acc_ref[...] = jnp.zeros(acc_ref.shape, jnp.float32)

    # (ts, dh) @ (dh, D) partial product for this head, accumulated in f32.
    acc_ref[...] += jnp.dot(a_ref[0, 0], w_ref[0],
                            preferred_element_type=jnp.float32)

    @pl.when(h == nh - 1)
    def _store():
        o_ref[0] = (acc_ref[...] + b_ref[...]).astype(o_ref.dtype)


# ----------------------------- wrapper ------------------------------------------------

def self_attention(x, w_in, b_in, w_out, b_out, *, n_heads: int,
                   causal_mask: bool = False,
                   q_tile: int = 256, kv_tile: int = 512, s_tile: int = 256):
    B, S, D = x.shape
    H = n_heads
    assert D % H == 0, "d_embed must be divisible by n_heads"
    dh = D // H
    scale = 1.0 / math.sqrt(dh)
    dtype = x.dtype

    # ---- host-side weight prep (done once, outside the kernels) ----
    # Fused per-head QKV weight (H, D, 3*dh); Q part pre-scaled by 1/sqrt(dh).
    w3 = w_in.reshape(3, H, dh, D)                                   # (3, H, dh, D)
    w_qkv = jnp.concatenate(
        [jnp.transpose(w3[0], (0, 2, 1)) * scale,
         jnp.transpose(w3[1], (0, 2, 1)),
         jnp.transpose(w3[2], (0, 2, 1))], axis=-1).astype(dtype)    # (H, D, 3*dh)
    b3 = b_in.reshape(3, H, 1, dh)
    b_qkv = jnp.concatenate([b3[0] * scale, b3[1], b3[2]],
                            axis=-1).astype(dtype)                   # (H, 1, 3*dh)
    # Out-proj weight, transposed and viewed per head: (H, dh, D).
    w_out_h = jnp.transpose(w_out).reshape(H, dh, D).astype(dtype)
    b_out2 = b_out.reshape(1, D).astype(dtype)

    ts = _pick_tile(S, s_tile)
    tq = _pick_tile(S, q_tile)
    tk = _pick_tile(S, kv_tile)
    assert S % ts == 0 and S % tq == 0 and S % tk == 0, \
        "_pick_tile must return divisors of S"

    vmem_limit = _vmem_limit_bytes()

    # ---- 1) fused QKV projection -> head-major (B, H, S, dh) q/k/v ----
    q, k, v = pl.pallas_call(
        functools.partial(_qkv_proj_kernel, dh=dh),
        out_shape=(jax.ShapeDtypeStruct((B, H, S, dh), dtype),
                   jax.ShapeDtypeStruct((B, H, S, dh), dtype),
                   jax.ShapeDtypeStruct((B, H, S, dh), dtype)),
        grid_spec=pltpu.PrefetchScalarGridSpec(
            num_scalar_prefetch=0,
            grid=(B, S // ts, H),                      # h innermost: x stays resident
            in_specs=[
                pl.BlockSpec((1, ts, D), lambda b, si, h: (b, si, 0)),      # x
                pl.BlockSpec((1, D, 3 * dh), lambda b, si, h: (h, 0, 0)),   # W_qkv head
                pl.BlockSpec((1, 1, 3 * dh), lambda b, si, h: (h, 0, 0)),   # b_qkv head
            ],
            out_specs=[
                pl.BlockSpec((1, 1, ts, dh), lambda b, si, h: (b, h, si, 0)),
                pl.BlockSpec((1, 1, ts, dh), lambda b, si, h: (b, h, si, 0)),
                pl.BlockSpec((1, 1, ts, dh), lambda b, si, h: (b, h, si, 0)),
            ],
        ),
        compiler_params=_compiler_params(
            ("parallel", "parallel", "arbitrary"), vmem_limit),
    )(x, w_qkv, b_qkv)

    # ---- 2) flash attention with online softmax ----
    if causal_mask:
        # Clamp skipped (fully above-diagonal) kv tiles to the last needed tile
        # so the BlockSpec pipeline sees an unchanged block index and skips the DMA.
        def kv_index(b, h, qi, ki):
            last_needed = (qi * tq + (tq - 1)) // tk
            return (b, h, jnp.minimum(ki, last_needed), 0)
    else:
        def kv_index(b, h, qi, ki):
            return (b, h, ki, 0)

    attn = pl.pallas_call(
        functools.partial(_flash_attn_kernel,
                          causal_mask=causal_mask, tq=tq, tk=tk),
        out_shape=jax.ShapeDtypeStruct((B, H, S, dh), dtype),
        grid_spec=pltpu.PrefetchScalarGridSpec(
            num_scalar_prefetch=0,
            grid=(B, H, S // tq, S // tk),
            in_specs=[
                pl.BlockSpec((1, 1, tq, dh), lambda b, h, qi, ki: (b, h, qi, 0)),
                pl.BlockSpec((1, 1, tk, dh), kv_index),
                pl.BlockSpec((1, 1, tk, dh), kv_index),
            ],
            out_specs=pl.BlockSpec((1, 1, tq, dh),
                                   lambda b, h, qi, ki: (b, h, qi, 0)),
            scratch_shapes=[
                pltpu.VMEM((tq, 1), jnp.float32),    # running max m
                pltpu.VMEM((tq, 1), jnp.float32),    # running denom l
                pltpu.VMEM((tq, dh), jnp.float32),   # output accumulator
            ],
        ),
        compiler_params=_compiler_params(
            ("parallel", "parallel", "parallel", "arbitrary"), vmem_limit),
    )(q, k, v)

    # ---- 3) output projection, head merge fused in (no XLA transpose) ----
    y = pl.pallas_call(
        _out_proj_kernel,
        out_shape=jax.ShapeDtypeStruct((B, S, D), dtype),
        grid_spec=pltpu.PrefetchScalarGridSpec(
            num_scalar_prefetch=0,
            grid=(B, S // ts, H),                     # h is the reduction axis
            in_specs=[
                pl.BlockSpec((1, 1, ts, dh), lambda b, si, h: (b, h, si, 0)),  # attn
                pl.BlockSpec((1, dh, D), lambda b, si, h: (h, 0, 0)),          # W_out^T head
                pl.BlockSpec((1, D), lambda b, si, h: (0, 0)),                 # b_out
            ],
            out_specs=pl.BlockSpec((1, ts, D), lambda b, si, h: (b, si, 0)),
            scratch_shapes=[pltpu.VMEM((ts, D), jnp.float32)],
        ),
        compiler_params=_compiler_params(
            ("parallel", "parallel", "arbitrary"), vmem_limit),
    )(attn, w_out_h, b_out2)
    return y


# ----------------------------- pure-JAX reference ------------------------------------

def self_attention_ref(x, w_in, b_in, w_out, b_out, *, n_heads: int,
                       causal_mask: bool = False):
    B, S, D = x.shape
    d_head = D // n_heads
    qkv = jnp.einsum('bsd,ed->bse', x, w_in) + b_in
    q, k, v = jnp.split(qkv, 3, axis=-1)

    def heads(t):
        return t.reshape(B, S, n_heads, d_head).transpose(0, 2, 1, 3)

    q, k, v = heads(q), heads(k), heads(v)
    w = jnp.einsum('bhqd,bhkd->bhqk', q, k)
    if causal_mask:
        mask = jnp.triu(jnp.ones((S, S), dtype=bool), 1)
        w = jnp.where(mask, -jnp.inf, w)
    w = w / math.sqrt(d_head)
    w = jax.nn.softmax(w, axis=-1)
    out = jnp.einsum('bhqk,bhkd->bhqd', w, v)
    out = out.transpose(0, 2, 1, 3).reshape(B, S, D)
    return jnp.einsum('bsd,ed->bse', out, w_out) + b_out


# ----------------------------- tests --------------------------------------------------

def _make_params(key, D):
    kx, kwi, kbi, kwo, kbo = jax.random.split(key, 5)
    w_in = jax.random.normal(kwi, (3 * D, D), dtype=jnp.float32) * 0.05
    b_in = jax.random.normal(kbi, (3 * D,), dtype=jnp.float32) * 0.05
    w_out = jax.random.normal(kwo, (D, D), dtype=jnp.float32) * 0.05
    b_out = jax.random.normal(kbo, (D,), dtype=jnp.float32) * 0.05
    return kx, w_in, b_in, w_out, b_out


if __name__ == "__main__":
    key = jax.random.PRNGKey(0)

    # Small shapes consistent with the module: batch=2, seq=8, d_embed=32, 4 heads.
    B, S, D, H = 2, 8, 32, 4
    kx, w_in, b_in, w_out, b_out = _make_params(key, D)
    x = jax.random.normal(kx, (B, S, D), dtype=jnp.float32)

    for causal in (False, True):
        y = jax.block_until_ready(
            self_attention(x, w_in, b_in, w_out, b_out, n_heads=H,
                           causal_mask=causal))
        y_ref = self_attention_ref(x, w_in, b_in, w_out, b_out, n_heads=H,
                                   causal_mask=causal)
        assert jnp.allclose(y, y_ref, atol=1e-2, rtol=1e-2), \
            f"mismatch vs reference (causal={causal})"

    # Larger case exercising the multi-tile flash path (2x2 q/kv tiles,
    # masked-tile skipping + clamped K/V DMA on the causal path).
    B2, S2, D2, H2 = 1, 256, 64, 4
    key2 = jax.random.PRNGKey(1)
    kx2, w_in2, b_in2, w_out2, b_out2 = _make_params(key2, D2)
    x2 = jax.random.normal(kx2, (B2, S2, D2), dtype=jnp.float32)

    for causal in (False, True):
        y2 = jax.block_until_ready(
            self_attention(x2, w_in2, b_in2, w_out2, b_out2, n_heads=H2,
                           causal_mask=causal,
                           q_tile=128, kv_tile=128, s_tile=128))
        y2_ref = self_attention_ref(x2, w_in2, b_in2, w_out2, b_out2,
                                    n_heads=H2, causal_mask=causal)
        assert jnp.allclose(y2, y2_ref, atol=1e-2, rtol=1e-2), \
            f"tiled mismatch vs reference (causal={causal})"

    print("KERNEL_OK")
</pallas_src>

<mosaic_0001>
module attributes {stable_mosaic.version = 11 : i64} {
  func.func @_qkv_proj_kernel(%arg0: i32, %arg1: i32, %arg2: i32, %arg3: memref<1x8x32xf32, #tpu.memory_space<vmem>>, %arg4: memref<1x32x24xf32, #tpu.memory_space<vmem>>, %arg5: memref<1x1x24xf32, #tpu.memory_space<vmem>>, %arg6: memref<1x1x8x8xf32, #tpu.memory_space<vmem>>, %arg7: memref<1x1x8x8xf32, #tpu.memory_space<vmem>>, %arg8: memref<1x1x8x8xf32, #tpu.memory_space<vmem>>) attributes {dimension_semantics = [#tpu.dimension_semantics<parallel>, #tpu.dimension_semantics<parallel>, #tpu.dimension_semantics<arbitrary>], iteration_bounds = array<i64: 2, 1, 4>, scalar_prefetch = 0 : i64, scratch_operands = 0 : i64, tpu.core_type = #tpu.core_type<tc>, window_params = [{transform_indices = @transform_0, window_bounds = array<i64: 1, 8, 32>}, {transform_indices = @transform_1, window_bounds = array<i64: 1, 32, 24>}, {transform_indices = @transform_2, window_bounds = array<i64: 1, 1, 24>}, {transform_indices = @transform_3, window_bounds = array<i64: 1, 1, 8, 8>}, {transform_indices = @transform_4, window_bounds = array<i64: 1, 1, 8, 8>}, {transform_indices = @transform_5, window_bounds = array<i64: 1, 1, 8, 8>}]} {
    %c0 = arith.constant 0 : index
    %c0_0 = arith.constant 0 : index
    %c0_1 = arith.constant 0 : index
    %0 = vector.load %arg3[%c0, %c0_0, %c0_1] : memref<1x8x32xf32, #tpu.memory_space<vmem>>, vector<1x8x32xf32>
    %1 = vector.shape_cast %0 : vector<1x8x32xf32> to vector<8x32xf32>
    %c0_2 = arith.constant 0 : index
    %c0_3 = arith.constant 0 : index
    %c0_4 = arith.constant 0 : index
    %2 = vector.load %arg4[%c0_2, %c0_3, %c0_4] : memref<1x32x24xf32, #tpu.memory_space<vmem>>, vector<1x32x24xf32>
    %3 = vector.shape_cast %2 : vector<1x32x24xf32> to vector<32x24xf32>
    %cst = arith.constant dense<0.000000e+00> : vector<8x24xf32>
    %4 = tpu.matmul %1, %3, %cst {dimension_numbers = #tpu.dot_dimension_numbers<[1], [0], [0], [1], [0, 0, 1, 1], [], []>} : vector<8x32xf32>, vector<32x24xf32>, vector<8x24xf32> -> vector<8x24xf32>
    %c0_5 = arith.constant 0 : index
    %c0_6 = arith.constant 0 : index
    %c0_7 = arith.constant 0 : index
    %5 = vector.load %arg5[%c0_5, %c0_6, %c0_7] : memref<1x1x24xf32, #tpu.memory_space<vmem>>, vector<1x1x24xf32>
    %6 = vector.shape_cast %5 : vector<1x1x24xf32> to vector<1x24xf32>
    %7 = vector.broadcast %6 : vector<1x24xf32> to vector<8x24xf32>
    %8 = arith.addf %4, %7 : vector<8x24xf32>
    %9 = vector.extract_strided_slice %8 {offsets = [0, 0], sizes = [8, 8], strides = [1, 1]} : vector<8x24xf32> to vector<8x8xf32>
    %c0_8 = arith.constant 0 : index
    %c0_9 = arith.constant 0 : index
    %c0_10 = arith.constant 0 : index
    %c0_11 = arith.constant 0 : index
    %10 = vector.load %arg6[%c0_8, %c0_9, %c0_10, %c0_11] : memref<1x1x8x8xf32, #tpu.memory_space<vmem>>, vector<1x1x8x8xf32>
    %11 = vector.shape_cast %10 : vector<1x1x8x8xf32> to vector<8x8xf32>
    %12 = vector.shape_cast %9 : vector<8x8xf32> to vector<1x1x8x8xf32>
    tpu.vector_store %arg6[%c0_8, %c0_9, %c0_10, %c0_11], %12 {strides = array<i32>} : memref<1x1x8x8xf32, #tpu.memory_space<vmem>>, vector<1x1x8x8xf32>,
    %13 = vector.extract_strided_slice %8 {offsets = [0, 8], sizes = [8, 8], strides = [1, 1]} : vector<8x24xf32> to vector<8x8xf32>
    %c0_12 = arith.constant 0 : index
    %c0_13 = arith.constant 0 : index
    %c0_14 = arith.constant 0 : index
    %c0_15 = arith.constant 0 : index
    %14 = vector.load %arg7[%c0_12, %c0_13, %c0_14, %c0_15] : memref<1x1x8x8xf32, #tpu.memory_space<vmem>>, vector<1x1x8x8xf32>
    %15 = vector.shape_cast %14 : vector<1x1x8x8xf32> to vector<8x8xf32>
    %16 = vector.shape_cast %13 : vector<8x8xf32> to vector<1x1x8x8xf32>
    tpu.vector_store %arg7[%c0_12, %c0_13, %c0_14, %c0_15], %16 {strides = array<i32>} : memref<1x1x8x8xf32, #tpu.memory_space<vmem>>, vector<1x1x8x8xf32>,
    %17 = vector.extract_strided_slice %8 {offsets = [0, 16], sizes = [8, 8], strides = [1, 1]} : vector<8x24xf32> to vector<8x8xf32>
    %c0_16 = arith.constant 0 : index
    %c0_17 = arith.constant 0 : index
    %c0_18 = arith.constant 0 : index
    %c0_19 = arith.constant 0 : index
    %18 = vector.load %arg8[%c0_16, %c0_17, %c0_18, %c0_19] : memref<1x1x8x8xf32, #tpu.memory_space<vmem>>, vector<1x1x8x8xf32>
    %19 = vector.shape_cast %18 : vector<1x1x8x8xf32> to vector<8x8xf32>
    %20 = vector.shape_cast %17 : vector<8x8xf32> to vector<1x1x8x8xf32>
    tpu.vector_store %arg8[%c0_16, %c0_17, %c0_18, %c0_19], %20 {strides = array<i32>} : memref<1x1x8x8xf32, #tpu.memory_space<vmem>>, vector<1x1x8x8xf32>,
    return
  }
  func.func @transform_0(%arg0: i32, %arg1: i32, %arg2: i32) -> (i32, i32, i32) {
    %c0_i32 = arith.constant 0 : i32
    %c0_i32_0 = arith.constant 0 : i32
    return %arg0, %arg1, %c0_i32 : i32, i32, i32
  }
  func.func @transform_1(%arg0: i32, %arg1: i32, %arg2: i32) -> (i32, i32, i32) {
    %c0_i32 = arith.constant 0 : i32
    %c0_i32_0 = arith.constant 0 : i32
    %c0_i32_1 = arith.constant 0 : i32
    return %arg2, %c0_i32, %c0_i32_0 : i32, i32, i32
  }
  func.func @transform_2(%arg0: i32, %arg1: i32, %arg2: i32) -> (i32, i32, i32) {
    %c0_i32 = arith.constant 0 : i32
    %c0_i32_0 = arith.constant 0 : i32
    %c0_i32_1 = arith.constant 0 : i32
    return %arg2, %c0_i32, %c0_i32_0 : i32, i32, i32
  }
  func.func @transform_3(%arg0: i32, %arg1: i32, %arg2: i32) -> (i32, i32, i32, i32) {
    %c0_i32 = arith.constant 0 : i32
    %c0_i32_0 = arith.constant 0 : i32
    return %arg0, %arg2, %arg1, %c0_i32 : i32, i32, i32, i32
  }
  func.func @transform_4(%arg0: i32, %arg1: i32, %arg2: i32) -> (i32, i32, i32, i32) {
    %c0_i32 = arith.constant 0 : i32
    %c0_i32_0 = arith.constant 0 : i32
    return %arg0, %arg2, %arg1, %c0_i32 : i32, i32, i32, i32
  }
  func.func @transform_5(%arg0: i32, %arg1: i32, %arg2: i32) -> (i32, i32, i32, i32) {
    %c0_i32 = arith.constant 0 : i32
    %c0_i32_0 = arith.constant 0 : i32
    return %arg0, %arg2, %arg1, %c0_i32 : i32, i32, i32, i32
  }
}

</mosaic_0001>

<llo_original>
// kernel: tpu_custom_call.1
$region0: #{tpu_custom_call.1}
  #allocation0 [shape = 'u32[]', space=smem, size = 0x4, offset = 0x4, fixed_abs, tag = 'smem constant byte address 0x4 - core index']
  #allocation1 [shape = 'u32[72,128]{1,0:T(1,128)}', space=vmem, size = 0x9000, scoped, tag = 'internal scratch']
  %s0 = inlined_call_operand.vmem [shape: f32[2,8,32], index: 0, kind: input, shape index: {}]
  %s1 = inlined_call_operand.vmem [shape: f32[4,32,24], index: 1, kind: input, shape index: {}]
  %s2 = inlined_call_operand.vmem [shape: f32[4,1,24], index: 2, kind: input, shape index: {}]
  %s3 = inlined_call_operand.hbm [shape: f32[2,4,8,8], index: 3, kind: output, shape index: {0}]
  %s4 = inlined_call_operand.hbm [shape: f32[2,4,8,8], index: 4, kind: output, shape index: {1}]
  %s5 = inlined_call_operand.hbm [shape: f32[2,4,8,8], index: 5, kind: output, shape index: {2}]
  %6 = xla_tuple %s3, %s4, %s5
  %s7 = sld [smem:[#allocation0]]
  $region61: #{tpu_custom_call.1} parent=0
    _
  %s9 = ssub.s32 1, %s7
  %s10 = scalar_select 0, %s9, %s7
  $region1: #{tpu_custom_call.1} parent=0
    #allocation2 [shape = 'u8[8192]{0}', space=vmem, size = 0x2000, scoped, tag = 'output window, operand 0']
    #allocation3 [shape = 's32[2]{0}', space=sflag, size = 0x8, scoped, tag = 'scoped memory for tpu_custom_call.1']
    #allocation4 [shape = 'u8[8192]{0}', space=vmem, size = 0x2000, scoped, tag = 'output window, operand 1']
    #allocation5 [shape = 's32[2]{0}', space=sflag, size = 0x8, scoped, tag = 'scoped memory for tpu_custom_call.1']
    #allocation6 [shape = 'u8[8192]{0}', space=vmem, size = 0x2000, scoped, tag = 'output window, operand 2']
    %11 = vsyncpa [#allocation3], 0
    %s12 = scalar_lea.sflag [#allocation3], 1
    %13 = vsyncpa %s12, 0
    %14 = vsyncpa [#allocation5], 0
    %s15 = scalar_lea.sflag [#allocation5], 1
    %16 = vsyncpa %s15, 0
    loop: start=0, step=1, limit=10
    $region2: #{tpu_custom_call.1} parent=1 // loop_pre_header
      _
    $region3: #{tpu_custom_call.1} parent=1 // loop_header
      %s18 = sphi 0, %s22
      %p19 = scmp.ge.s32.totalorder %s18, 10
      %s25 = sphi 0, %s44
      %s26 = sphi 0, %s40
      %s27 = sphi 0, %s36
      %s28 = sphi 0, %s25
      %s29 = sphi 0, %s26
      %s30 = sphi 0, %s27
      %s31 = sphi 0, %s28
      %s32 = sphi 0, %s29
      %s33 = sphi 0, %s30
      %s49 = sphi 0, %s51
      %s52 = sphi 0, %s49
      %s53 = sphi 0, %s52
      %s69 = sphi 0, %s53
      %s75 = sphi 0, %s77
      %s78 = sphi 0, %s75
      %s79 = sphi 0, %s78
      %s95 = sphi 0, %s79
      %s101 = sphi 0, %s103
      %s104 = sphi 0, %s101
      %s105 = sphi 0, %s104
      %s121 = sphi 0, %s105
      %s131 = sphi 0, %s133
      %s134 = sphi 0, %s131
      %s135 = sphi 0, %s134
      %s151 = sphi 0, %s135
      %s161 = sphi 0, %s163
      %s164 = sphi 0, %s161
      %s165 = sphi 0, %s164
      %s181 = sphi 0, %s165
      %s191 = sphi 0, %s193
      %s194 = sphi 0, %s191
      %s195 = sphi 0, %s194
      %s211 = sphi 0, %s195
    $region4: #{tpu_custom_call.1} parent=1 // loop_header_branch
      %21 = sbr.rel (%p19) target = $region8
    $region5: #{tpu_custom_call.1} parent=1 // loop_body
      %s23 = ssub.s32 %s18, 1
      %s24 = ssub.s32 %s18, 2
      %s34 = sadd.s32 1, %s27
      %p35 = scmp.ge.s32.totalorder %s34, 4
      %s36 = scalar_select %p35, 0, %s34
      %s37 = sadd.s32 1, %s26
      %s38 = scalar_select %p35, %s37, %s26
      %p39 = scmp.ge.s32.totalorder %s38, 1
      %s40 = scalar_select %p39, 0, %s38
      %s41 = sadd.s32 1, %s25
      %s42 = scalar_select %p39, %s41, %s25
      %p43 = scmp.ge.s32.totalorder %s42, 2
      %s44 = scalar_select %p43, 0, %s42
      %s45 = ssub.s32 %s25, %s44
      %s46 = ssub.s32 %s26, %s40
      %s47 = sor.u32 %s45, %s46
      %p48 = scmp.eq.s32.totalorder %s47, 0
      %s50 = sadd.s32 %s49, 1
      %s51 = scalar_select %p48, %s49, %s50
      %p54 = pneg %p48
      %p55 = scmp.eq.s32.totalorder %s18, 7
      %p56 = por %p54, %p55
      %p57 = scmp.ne.s32.totalorder %s49, %s52
      %p58 = scmp.eq.s32.totalorder %s18, 0
      %p59 = por %p57, %p58
      %p60 = scmp.ne.s32.totalorder %s49, %s52
      %p61 = scmp.eq.s32.totalorder %s23, 7
      %p62 = por %p60, %p61
      %p63 = scmp.ne.s32.totalorder %s52, %s53
      %p64 = scmp.eq.s32.totalorder %s23, 0
      %p65 = por %p63, %p64
      %p66 = scmp.ne.s32.totalorder %s52, %s53
      %p67 = scmp.eq.s32.totalorder %s24, 7
      %p68 = por %p66, %p67
      %p70 = scmp.ne.s32.totalorder %s53, %s69
      %p71 = scmp.eq.s32.totalorder %s24, 0
      %p72 = por %p70, %p71
      %s73 = ssub.s32 %s27, %s36
      %p74 = scmp.eq.s32.totalorder %s73, 0
      %s76 = sadd.s32 %s75, 1
      %s77 = scalar_select %p74, %s75, %s76
      %p80 = pneg %p74
      %p81 = scmp.eq.s32.totalorder %s18, 7
      %p82 = por %p80, %p81
      %p83 = scmp.ne.s32.totalorder %s75, %s78
      %p84 = scmp.eq.s32.totalorder %s18, 0
      %p85 = por %p83, %p84
      %p86 = scmp.ne.s32.totalorder %s75, %s78
      %p87 = scmp.eq.s32.totalorder %s23, 7
      %p88 = por %p86, %p87
      %p89 = scmp.ne.s32.totalorder %s78, %s79
      %p90 = scmp.eq.s32.totalorder %s23, 0
      %p91 = por %p89, %p90
      %p92 = scmp.ne.s32.totalorder %s78, %s79
      %p93 = scmp.eq.s32.totalorder %s24, 7
      %p94 = por %p92, %p93
      %p96 = scmp.ne.s32.totalorder %s79, %s95
      %p97 = scmp.eq.s32.totalorder %s24, 0
      %p98 = por %p96, %p97
      %s99 = ssub.s32 %s27, %s36
      %p100 = scmp.eq.s32.totalorder %s99, 0
      %s102 = sadd.s32 %s101, 1
      %s103 = scalar_select %p100, %s101, %s102
      %p106 = pneg %p100
      %p107 = scmp.eq.s32.totalorder %s18, 7
      %p108 = por %p106, %p107
      %p109 = scmp.ne.s32.totalorder %s101, %s104
      %p110 = scmp.eq.s32.totalorder %s18, 0
      %p111 = por %p109, %p110
      %p112 = scmp.ne.s32.totalorder %s101, %s104
      %p113 = scmp.eq.s32.totalorder %s23, 7
      %p114 = por %p112, %p113
      %p115 = scmp.ne.s32.totalorder %s104, %s105
      %p116 = scmp.eq.s32.totalorder %s23, 0
      %p117 = por %p115, %p116
      %p118 = scmp.ne.s32.totalorder %s104, %s105
      %p119 = scmp.eq.s32.totalorder %s24, 7
      %p120 = por %p118, %p119
      %p122 = scmp.ne.s32.totalorder %s105, %s121
      %p123 = scmp.eq.s32.totalorder %s24, 0
      %p124 = por %p122, %p123
      %s125 = ssub.s32 %s25, %s44
      %s126 = ssub.s32 %s27, %s36
      %s127 = sor.u32 %s125, %s126
      %s128 = ssub.s32 %s26, %s40
      %s129 = sor.u32 %s127, %s128
      %p130 = scmp.eq.s32.totalorder %s129, 0
      %s132 = sadd.s32 %s131, 1
      %s133 = scalar_select %p130, %s131, %s132
      %p136 = pneg %p130
      %p137 = scmp.eq.s32.totalorder %s18, 7
      %p138 = por %p136, %p137
      %p139 = scmp.ne.s32.totalorder %s131, %s134
      %p140 = scmp.eq.s32.totalorder %s18, 0
      %p141 = por %p139, %p140
      %p142 = scmp.ne.s32.totalorder %s131, %s134
      %p143 = scmp.eq.s32.totalorder %s23, 7
      %p144 = por %p142, %p143
      %p145 = scmp.ne.s32.totalorder %s134, %s135
      %p146 = scmp.eq.s32.totalorder %s23, 0
      %p147 = por %p145, %p146
      %p148 = scmp.ne.s32.totalorder %s134, %s135
      %p149 = scmp.eq.s32.totalorder %s24, 7
      %p150 = por %p148, %p149
      %p152 = scmp.ne.s32.totalorder %s135, %s151
      %p153 = scmp.eq.s32.totalorder %s24, 0
      %p154 = por %p152, %p153
      %s155 = ssub.s32 %s25, %s44
      %s156 = ssub.s32 %s27, %s36
      %s157 = sor.u32 %s155, %s156
      %s158 = ssub.s32 %s26, %s40
      %s159 = sor.u32 %s157, %s158
      %p160 = scmp.eq.s32.totalorder %s159, 0
      %s162 = sadd.s32 %s161, 1
      %s163 = scalar_select %p160, %s161, %s162
      %p166 = pneg %p160
      %p167 = scmp.eq.s32.totalorder %s18, 7
      %p168 = por %p166, %p167
      %p169 = scmp.ne.s32.totalorder %s161, %s164
      %p170 = scmp.eq.s32.totalorder %s18, 0
      %p171 = por %p169, %p170
      %p172 = scmp.ne.s32.totalorder %s161, %s164
      %p173 = scmp.eq.s32.totalorder %s23, 7
      %p174 = por %p172, %p173
      %p175 = scmp.ne.s32.totalorder %s164, %s165
      %p176 = scmp.eq.s32.totalorder %s23, 0
      %p177 = por %p175, %p176
      %p178 = scmp.ne.s32.totalorder %s164, %s165
      %p179 = scmp.eq.s32.totalorder %s24, 7
      %p180 = por %p178, %p179
      %p182 = scmp.ne.s32.totalorder %s165, %s181
      %p183 = scmp.eq.s32.totalorder %s24, 0
      %p184 = por %p182, %p183
      %s185 = ssub.s32 %s25, %s44
      %s186 = ssub.s32 %s27, %s36
      %s187 = sor.u32 %s185, %s186
      %s188 = ssub.s32 %s26, %s40
      %s189 = sor.u32 %s187, %s188
      %p190 = scmp.eq.s32.totalorder %s189, 0
      %s192 = sadd.s32 %s191, 1
      %s193 = scalar_select %p190, %s191, %s192
      %p196 = pneg %p190
      %p197 = scmp.eq.s32.totalorder %s18, 7
      %p198 = por %p196, %p197
      %p199 = scmp.ne.s32.totalorder %s191, %s194
      %p200 = scmp.eq.s32.totalorder %s18, 0
      %p201 = por %p199, %p200
      %p202 = scmp.ne.s32.totalorder %s191, %s194
      %p203 = scmp.eq.s32.totalorder %s23, 7
      %p204 = por %p202, %p203
      %p205 = scmp.ne.s32.totalorder %s194, %s195
      %p206 = scmp.eq.s32.totalorder %s23, 0
      %p207 = por %p205, %p206
      %p208 = scmp.ne.s32.totalorder %s194, %s195
      %p209 = scmp.eq.s32.totalorder %s24, 7
      %p210 = por %p208, %p209
      %p212 = scmp.ne.s32.totalorder %s195, %s211
      %p213 = scmp.eq.s32.totalorder %s24, 0
      %p214 = por %p212, %p213
      %p215 = scmp.le.s32.totalorder 1, %s18
      %p216 = scmp.lt.s32.totalorder %s18, 9
      %p217 = pnand %p215, %p216
      %p218 = pneg %p217
      // Predicated region
      $region9: #{tpu_custom_call.1} parent=5 // pred_check
        _
      $region10: #{tpu_custom_call.1} parent=5 // pred_check_branch
        %220 = sbr.rel (%p217) target = $region12
      $region11: #{tpu_custom_call.1} parent=5 // pred_region
        %s221 = ssub.s32 %s18, 1
      $region12: #{tpu_custom_call.1} parent=5 // pred_fallthru
        _
      %p222 = scmp.lt.s32.totalorder %s18, 8
      // Predicated region
      $region13: #{tpu_custom_call.1} parent=5 // pred_check
        %p223 = pneg %p222
      $region14: #{tpu_custom_call.1} parent=5 // pred_check_branch
        %225 = sbr.rel (%p223) target = $region16
      $region15: #{tpu_custom_call.1} parent=5 // pred_region
        // Predicated region
        $region17: #{tpu_custom_call.1} parent=15 // pred_check
          %p226 = pneg %p59
        $region18: #{tpu_custom_call.1} parent=15 // pred_check_branch
          %228 = sbr.rel (%p226) target = $region20
        $region19: #{tpu_custom_call.1} parent=15 // pred_region
          %p229 = scmp.lt.s32.totalorder %s25, 1
          %s230 = scalar_select %p229, %s25, 1
          %p231 = scmp.lt.s32.totalorder %s26, 0
          %s232 = scalar_select %p231, %s26, 0
          %s233 = sadd.s32 %s232, %s230
          %s234 = smul.addr %s233, 8
          %s235 = scalar_lea.vmem %s0, %s234
        $region20: #{tpu_custom_call.1} parent=15 // pred_fallthru
          _
        // Predicated region
        $region21: #{tpu_custom_call.1} parent=15 // pred_check
          %p236 = pneg %p85
        $region22: #{tpu_custom_call.1} parent=15 // pred_check_branch
          %238 = sbr.rel (%p236) target = $region24
        $region23: #{tpu_custom_call.1} parent=15 // pred_region
          %p239 = scmp.lt.s32.totalorder %s27, 3
          %s240 = scalar_select %p239, %s27, 3
          %s241 = smul.addr %s240, 4
          %s242 = smul.addr %s241, 8
          %s243 = scalar_lea.vmem %s1, %s242
        $region24: #{tpu_custom_call.1} parent=15 // pred_fallthru
          _
        // Predicated region
        $region25: #{tpu_custom_call.1} parent=15 // pred_check
          %p244 = pneg %p111
        $region26: #{tpu_custom_call.1} parent=15 // pred_check_branch
          %246 = sbr.rel (%p244) target = $region28
        $region27: #{tpu_custom_call.1} parent=15 // pred_region
          %p247 = scmp.lt.s32.totalorder %s27, 3
          %s248 = scalar_select %p247, %s27, 3
          %s249 = scalar_lea.vmem %s2, %s248
        $region28: #{tpu_custom_call.1} parent=15 // pred_fallthru
          _
      $region16: #{tpu_custom_call.1} parent=5 // pred_fallthru
        _
      %p250 = scmp.le.s32.totalorder 1, %s18
      %p251 = scmp.lt.s32.totalorder %s18, 9
      %p252 = pnand %p250, %p251
      %p253 = pneg %p252
      // Predicated region
      $region29: #{tpu_custom_call.1} parent=5 // pred_check
        _
      $region30: #{tpu_custom_call.1} parent=5 // pred_check_branch
        %255 = sbr.rel (%p252) target = $region32
      $region31: #{tpu_custom_call.1} parent=5 // pred_region
        %s256 = ssub.s32 %s18, 1
        %p257 = scmp.lt.s32.totalorder %s28, 1
        %s258 = scalar_select %p257, %s28, 1
        %p259 = scmp.lt.s32.totalorder %s29, 0
        %s260 = scalar_select %p259, %s29, 0
        %s261 = sadd.s32 %s260, %s258
        %s262 = smul.addr %s261, 8
        %s263 = scalar_lea.vmem %s0, %s262
        %p264 = pneg %p65
        %p265 = pneg %p62
        %p266 = scmp.lt.s32.totalorder %s30, 3
        %s267 = scalar_select %p266, %s30, 3
        %s268 = smul.addr %s267, 4
        %s269 = smul.addr %s268, 8
        %s270 = scalar_lea.vmem %s1, %s269
        %p271 = pneg %p91
        %p272 = pneg %p88
        %p273 = scmp.lt.s32.totalorder %s30, 3
        %s274 = scalar_select %p273, %s30, 3
        %s275 = scalar_lea.vmem %s2, %s274
        %p276 = pneg %p117
        %p277 = pneg %p114
        %p278 = pneg %p147
        %p279 = pneg %p144
        %s280 = sand.u32 %s134, 1
        %s281 = scalar_lea.sflag [#allocation3], %s280
        %s282 = sand.u32 %s134, 1
        %s283 = smul.addr %s282, 8
        %s284 = scalar_lea.vmem [#allocation2], %s283
        %p285 = pneg %p177
        %p286 = pneg %p174
        %s287 = sand.u32 %s23, 1
        %s288 = scalar_lea.sflag [#allocation5], %s287
        %s289 = sand.u32 %s164, 1
        %s290 = smul.addr %s289, 8
        %s291 = scalar_lea.vmem [#allocation4], %s290
        %p292 = pneg %p207
        %p293 = pneg %p204
        %s294 = sand.u32 %s23, 1
        %s295 = scalar_lea.sflag [#allocation5], %s294
        %s296 = sand.u32 %s194, 1
        %s297 = smul.addr %s296, 8
        %s298 = scalar_lea.vmem [#allocation6], %s297
        %p299 = scmp.lt.s32.totalorder %s28, 1
        %s300 = scalar_select %p299, %s28, 1
        %p301 = scmp.lt.s32.totalorder %s29, 0
        %s302 = scalar_select %p301, %s29, 0
        %s303 = sadd.s32 %s302, %s300
        %s304 = smul.addr %s303, 8
        %s305 = scalar_lea.vmem %s0, %s304
        %p306 = scmp.lt.s32.totalorder %s30, 3
        %s307 = scalar_select %p306, %s30, 3
        %s308 = smul.addr %s307, 4
        %s309 = smul.addr %s308, 8
        %s310 = scalar_lea.vmem %s1, %s309
        %p311 = scmp.lt.s32.totalorder %s30, 3
        %s312 = scalar_select %p311, %s30, 3
        %s313 = scalar_lea.vmem %s2, %s312
        %v314 = vld [vmem:[%s305] sm:$0xff]
        %v315 = vld [vmem:[%s310] sm:$0xff]
        %v316 = vld [vmem:[%s310 + $0x8] sm:$0xff]
        %v317 = vld [vmem:[%s310 + $0x10] sm:$0xff]
        %v318 = vld [vmem:[%s310 + $0x18] sm:$0xff]
        %v319 = vld [vmem:[%s313] sm:$0x1]
        %v321 = vperm.slane %v319, 0
        %vm323 = vcmask 261120
        %v325 = vsel %vm323, %v314, 0
        %327 = vmatpush.msra.mxu0 0.0
        %328 = vmatpush.msra.mxu0 0.0
        %329 = vmatpush.msra.mxu0 0.0
        %330 = vmatpush.msra.mxu0 0.0
        %331 = vmatpush.msra.mxu0 0.0
        %332 = vmatpush.msra.mxu0 0.0
        %333 = vmatpush.msra.mxu0 0.0
        %334 = vmatpush.msra.mxu0 0.0
        %335 = vmatpush.msra.mxu0 0.0
        %336 = vmatpush.msra.mxu0 0.0
        %337 = vmatpush.msra.mxu0 0.0
        %338 = vmatpush.msra.mxu0 0.0
        %339 = vmatpush.msra.mxu0 %v318
        %340 = vmatpush.msra.mxu0 %v317
        %341 = vmatpush.msra.mxu0 %v316
        %342 = vmatpush.msra.mxu0 %v315
        %343 = vmatmul.f32.gmra.mxu0 %v325
        %v344 = vpop.f32.mrf.mxu0
        %v345 = vadd.f32 %v321, %v344
        %346 = vdwg.mxu0
        %vm347 = vcmask 64512
        %348 = vst.msk [vmem:[%s284] sm:$0xff] %vm347, %v345
        %350 = vrot.lane.b32.xlu0 %v345, 120
        %v351 = vpop.permute.xlu0 %350
        %353 = vst.msk [vmem:[%s291] sm:$0xff] %vm347, %v351
        %354 = vrot.lane.b32.xlu0 %v345, 112
        %v355 = vpop.permute.xlu0 %354
        %357 = vst.msk [vmem:[%s298] sm:$0xff] %vm347, %v355
        %s358 = sand.u32 %s134, 1
        %s359 = scalar_lea.sflag [#allocation3], %s358
        %s360 = sand.u32 %s134, 1
        %s361 = smul.addr %s360, 8
        %s362 = scalar_lea.vmem [#allocation2], %s361
        %s363 = sand.u32 %s23, 1
        %s364 = scalar_lea.sflag [#allocation5], %s363
        %s365 = sand.u32 %s164, 1
        %s366 = smul.addr %s365, 8
        %s367 = scalar_lea.vmem [#allocation4], %s366
        %s368 = sand.u32 %s23, 1
        %s369 = scalar_lea.sflag [#allocation5], %s368
        %s370 = sand.u32 %s194, 1
        %s371 = smul.addr %s370, 8
        %s372 = scalar_lea.vmem [#allocation6], %s371
        // Predicated region
        $region33: #{tpu_custom_call.1} parent=31 // pred_check
          %p373 = pneg %p144
        $region34: #{tpu_custom_call.1} parent=31 // pred_check_branch
          %375 = sbr.rel (%p373) target = $region36
        $region35: #{tpu_custom_call.1} parent=31 // pred_region
          %377 = vsyncadd %s359, 0
          %s378 = sadd.s32 %s29, %s30
          %s379 = smul.addr %s28, 4
          %s380 = sadd.s32 %s378, %s379
          %s381 = smul.addr %s380, 8
          %s382 = scalar_lea.hbm %s3, %s381
          %s384 = sshll.u32 %s362, 4
          %s385 = int_to_ptr.vmem [resolvable:$true] %s384
          %s386 = sshll.u32 %s382, 4
          %s387 = int_to_ptr.hbm [resolvable:$true] %s386
          %389 = dma.vmem_to_hbm [thread:$0]  %s385, 128, %s387, %s359
        $region36: #{tpu_custom_call.1} parent=31 // pred_fallthru
          _
        // Predicated region
        $region37: #{tpu_custom_call.1} parent=31 // pred_check
          %p390 = pneg %p174
        $region38: #{tpu_custom_call.1} parent=31 // pred_check_branch
          %392 = sbr.rel (%p390) target = $region40
        $region39: #{tpu_custom_call.1} parent=31 // pred_region
          %394 = vsyncadd %s364, 0
          %s395 = sadd.s32 %s29, %s30
          %s396 = smul.addr %s28, 4
          %s397 = sadd.s32 %s395, %s396
          %s398 = smul.addr %s397, 8
          %s399 = scalar_lea.hbm %s4, %s398
          %s401 = sshll.u32 %s367, 4
          %s402 = int_to_ptr.vmem [resolvable:$true] %s401
          %s403 = sshll.u32 %s399, 4
          %s404 = int_to_ptr.hbm [resolvable:$true] %s403
          %406 = dma.vmem_to_hbm [thread:$0]  %s402, 128, %s404, %s364
        $region40: #{tpu_custom_call.1} parent=31 // pred_fallthru
          _
        // Predicated region
        $region41: #{tpu_custom_call.1} parent=31 // pred_check
          %p407 = pneg %p204
        $region42: #{tpu_custom_call.1} parent=31 // pred_check_branch
          %409 = sbr.rel (%p407) target = $region44
        $region43: #{tpu_custom_call.1} parent=31 // pred_region
          %411 = vsyncadd %s369, 0
          %s412 = sadd.s32 %s29, %s30
          %s413 = smul.addr %s28, 4
          %s414 = sadd.s32 %s412, %s413
          %s415 = smul.addr %s414, 8
          %s416 = scalar_lea.hbm %s5, %s415
          %s418 = sshll.u32 %s372, 4
          %s419 = int_to_ptr.vmem [resolvable:$true] %s418
          %s420 = sshll.u32 %s416, 4
          %s421 = int_to_ptr.hbm [resolvable:$true] %s420
          %423 = dma.vmem_to_hbm [thread:$0]  %s419, 128, %s421, %s369
        $region44: #{tpu_custom_call.1} parent=31 // pred_fallthru
          _
      $region32: #{tpu_custom_call.1} parent=5 // pred_fallthru
        _
      %p424 = scmp.le.s32.totalorder 2, %s18
      // Predicated region
      $region45: #{tpu_custom_call.1} parent=5 // pred_check
        %p425 = pneg %p424
      $region46: #{tpu_custom_call.1} parent=5 // pred_check_branch
        %427 = sbr.rel (%p425) target = $region48
      $region47: #{tpu_custom_call.1} parent=5 // pred_region
        %s428 = ssub.s32 %s18, 2
        // Predicated region
        $region49: #{tpu_custom_call.1} parent=47 // pred_check
          %p429 = pneg %p150
        $region50: #{tpu_custom_call.1} parent=47 // pred_check_branch
          %431 = sbr.rel (%p429) target = $region52
        $region51: #{tpu_custom_call.1} parent=47 // pred_region
          %s432 = sand.u32 %s135, 1
          %s433 = scalar_lea.sflag [#allocation3], %s432
          %s434 = sand.u32 %s135, 1
          %s435 = smul.addr %s434, 8
          %s436 = scalar_lea.vmem [#allocation2], %s435
          %438 = dma.done %s433, 128
        $region52: #{tpu_custom_call.1} parent=47 // pred_fallthru
          _
        // Predicated region
        $region53: #{tpu_custom_call.1} parent=47 // pred_check
          %p439 = pneg %p180
        $region54: #{tpu_custom_call.1} parent=47 // pred_check_branch
          %441 = sbr.rel (%p439) target = $region56
        $region55: #{tpu_custom_call.1} parent=47 // pred_region
          %s442 = sand.u32 %s24, 1
          %s443 = scalar_lea.sflag [#allocation5], %s442
          %s444 = sand.u32 %s165, 1
          %s445 = smul.addr %s444, 8
          %s446 = scalar_lea.vmem [#allocation4], %s445
          %448 = dma.done %s443, 128
        $region56: #{tpu_custom_call.1} parent=47 // pred_fallthru
          _
        // Predicated region
        $region57: #{tpu_custom_call.1} parent=47 // pred_check
          %p449 = pneg %p210
        $region58: #{tpu_custom_call.1} parent=47 // pred_check_branch
          %451 = sbr.rel (%p449) target = $region60
        $region59: #{tpu_custom_call.1} parent=47 // pred_region
          %s452 = sand.u32 %s24, 1
          %s453 = scalar_lea.sflag [#allocation5], %s452
          %s454 = sand.u32 %s195, 1
          %s455 = smul.addr %s454, 8
          %s456 = scalar_lea.vmem [#allocation6], %s455
          %458 = dma.done %s453, 128
        $region60: #{tpu_custom_call.1} parent=47 // pred_fallthru
          _
      $region48: #{tpu_custom_call.1} parent=5 // pred_fallthru
        _
    $region6: #{tpu_custom_call.1} parent=1 // loop_footer
      %s22 = sadd.s32 1, %s18
    $region7: #{tpu_custom_call.1} parent=1 // loop_footer_branch
      %17 = sbr.rel target = $region3
    $region8: #{tpu_custom_call.1} parent=1 // loop_exit
      _
    %459 = vsyncpa [#allocation3], 1
    %s460 = scalar_lea.sflag [#allocation3], 1
    %461 = vsyncpa %s460, 1
    %462 = vsyncpa [#allocation5], 1
    %s463 = scalar_lea.sflag [#allocation5], 1
    %464 = vsyncpa %s463, 1

</llo_original>
